<compile_context>
chip_gen: v7x
topology: tpu7x:2x2x1
jax: 0.10.0
libtpu: 0.0.40
codegen_flags: <defaults>
</compile_context>

<pallas_src>
import functools

import jax
import jax.numpy as jnp
from jax.experimental import pallas as pl
from jax.experimental.pallas import tpu as pltpu

_LANE = 128       # lane width: last-dim alignment for weights / output
_SUBLANE = 8      # f32 sublane width: batch-tile alignment
_TM_CAP = 4096    # upper bound on the batch tile
_VMEM_FALLBACK_BYTES = 64 * 1024 * 1024   # v7x per-TC VMEM; safe on all gens


def _round_up(x, m):
    return (x + m - 1) // m * m


def _pad2d(a, rows, cols):
    r, c = a.shape
    return jnp.pad(a, ((0, rows - r), (0, cols - c)))


def _vmem_capacity_bytes():
    try:
        return int(pltpu.get_tpu_info().vmem_capacity_bytes)
    except Exception:  # interpret mode / older runtimes
        return _VMEM_FALLBACK_BYTES


def mlp_kernel(x_ref, w1_ref, b1_ref, w2_ref, b2_ref, w3_ref, b3_ref, out_ref):
    """One (TM, K) activation tile through all three layers, VMEM-resident."""
    cdt = w1_ref.dtype                       # MXU input dtype (f32 or bf16)
    x = x_ref[...].astype(cdt)

    # Layer 1: Linear + ReLU (Dropout = identity at inference).
    h1 = jnp.dot(x, w1_ref[...], preferred_element_type=jnp.float32)
    h1 = jnp.maximum(h1 + b1_ref[...], 0.0)          # bias/ReLU stay f32 (VPU)

    # Layer 2: Linear + ReLU.
    h2 = jnp.dot(h1.astype(cdt), w2_ref[...], preferred_element_type=jnp.float32)
    h2 = jnp.maximum(h2 + b2_ref[...], 0.0)

    # Output layer (no activation). OUT is lane-padded to 128 -> unmasked vst;
    # the wrapper slices padding columns off.
    y = jnp.dot(h2.astype(cdt), w3_ref[...], preferred_element_type=jnp.float32)
    out_ref[...] = (y + b3_ref[...]).astype(out_ref.dtype)


def prepare_params(params, mxu_dtype=jnp.float32):
    """One-time weight padding/cast, hoisted out of the per-call path.

    Only lane (output) dims of weights are zero-padded to multiples of 128;
    w1's K row dim stays unpadded so x needs no padding at all.  Biases stay
    f32 so the bias-add / ReLU run in f32 on every TPU generation.
    """
    w1, b1 = params["w1"], params["b1"]
    w2, b2 = params["w2"], params["b2"]
    w3, b3 = params["w3"], params["b3"]
    K, H1 = w1.shape
    H2 = w2.shape[1]
    OUT = w3.shape[1]
    H1_p = _round_up(H1, _LANE)
    H2_p = _round_up(H2, _LANE)
    O_p = _round_up(OUT, _LANE)
    return {
        "w1": _pad2d(w1, K, H1_p).astype(mxu_dtype),
        "b1": _pad2d(b1.reshape(1, -1), 1, H1_p).astype(jnp.float32),
        "w2": _pad2d(w2, H1_p, H2_p).astype(mxu_dtype),
        "b2": _pad2d(b2.reshape(1, -1), 1, H2_p).astype(jnp.float32),
        "w3": _pad2d(w3, H2_p, O_p).astype(mxu_dtype),
        "b3": _pad2d(b3.reshape(1, -1), 1, O_p).astype(jnp.float32),
    }


@functools.partial(jax.jit, static_argnames=("output_size",))
def mlp_forward(x, prepared, *, output_size):
    """x: (batch, seq_len, features).  prepared: output of prepare_params."""
    batch, seq_len, feat = x.shape
    x2d = x.reshape(batch, seq_len * feat)   # same as torch .view

    w1, b1 = prepared["w1"], prepared["b1"]
    w2, b2 = prepared["w2"], prepared["b2"]
    w3, b3 = prepared["w3"], prepared["b3"]
    K, H1_p = w1.shape
    H2_p = w2.shape[1]
    O_p = w3.shape[1]
    assert x2d.shape[1] == K, (x2d.shape, w1.shape)
    assert output_size <= O_p

    w_isz = w1.dtype.itemsize
    x_isz = x2d.dtype.itemsize

    # ---- batch tile TM derived from the chip's VMEM budget ----------------
    vmem_cap = _vmem_capacity_bytes()
    resident = (w_isz * (K * H1_p + H1_p * H2_p + H2_p * O_p)     # weights (1 buf)
                + 4 * (H1_p + H2_p + O_p))                        # biases  (1 buf)
    # per-row cost: x tile (2 pipeline bufs) + out tile (2 bufs) + live f32 h1/h2
    per_row = 2 * K * x_isz + 2 * O_p * 4 + 2 * (H1_p + H2_p) * 4
    budget = vmem_cap // 2 - resident       # keep >= half of VMEM as headroom
    # TODO(synk): if `budget` goes negative (hidden sizes ~2K+), stream the
    # largest weight over a K/N grid axis with a pl.when-initialized VMEM
    # accumulator instead of keeping all weights resident.
    tm = max(budget // max(per_row, 1), _SUBLANE)
    tm = min(tm, _TM_CAP, _round_up(batch, _SUBLANE))
    tm = max((tm // _SUBLANE) * _SUBLANE, _SUBLANE)
    grid_m = pl.cdiv(batch, tm)

    # ---- VMEM limit clamped to the real chip capacity ---------------------
    need = resident + tm * per_row
    vmem_limit = int(min(int(vmem_cap * 0.85), max(need * 2, 16 << 20)))

    # ---- advisory cost estimate (unpadded x/batch; padded hidden dims) ----
    flops = 2 * batch * (K * H1_p + H1_p * H2_p + H2_p * O_p)
    bytes_accessed = int(x2d.size * x_isz
                         + w_isz * (K * H1_p + H1_p * H2_p + H2_p * O_p)
                         + 4 * (H1_p + H2_p + O_p)
                         + batch * O_p * 4)
    cost = pl.CostEstimate(flops=flops, transcendentals=0,
                           bytes_accessed=bytes_accessed)

    const = lambda i: (0, 0)
    resident_buf = pl.Buffered(1)   # constant index map -> no double buffering

    out_padded = pl.pallas_call(
        mlp_kernel,
        out_shape=jax.ShapeDtypeStruct((batch, O_p), jnp.float32),
        grid=(grid_m,),
        in_specs=[
            pl.BlockSpec((tm, K), lambda i: (i, 0)),                       # x (pipelined over M)
            pl.BlockSpec((K, H1_p), const, pipeline_mode=resident_buf),    # w1 (resident)
            pl.BlockSpec((1, H1_p), const, pipeline_mode=resident_buf),    # b1
            pl.BlockSpec((H1_p, H2_p), const, pipeline_mode=resident_buf), # w2
            pl.BlockSpec((1, H2_p), const, pipeline_mode=resident_buf),    # b2
            pl.BlockSpec((H2_p, O_p), const, pipeline_mode=resident_buf),  # w3
            pl.BlockSpec((1, O_p), const, pipeline_mode=resident_buf),     # b3
        ],
        out_specs=pl.BlockSpec((tm, O_p), lambda i: (i, 0)),
        compiler_params=pltpu.CompilerParams(
            dimension_semantics=("parallel",),      # shard over TCs on v7x
            vmem_limit_bytes=vmem_limit,
        ),
        cost_estimate=cost,
    )(x2d, w1, b1, w2, b2, w3, b3)

    return out_padded[:, :output_size]


def init_params(key, input_size, hidden_sizes, output_size):
    """Deterministic init mimicking nn.Linear defaults (uniform +-1/sqrt(fan_in))."""
    sizes = [input_size] + list(hidden_sizes) + [output_size]
    params = {}
    for i, (d_in, d_out) in enumerate(zip(sizes[:-1], sizes[1:])):
        key, kw, kb = jax.random.split(key, 3)
        bound = 1.0 / jnp.sqrt(jnp.float32(d_in))
        params[f"w{i + 1}"] = jax.random.uniform(
            kw, (d_in, d_out), jnp.float32, -bound, bound)
        params[f"b{i + 1}"] = jax.random.uniform(
            kb, (1, d_out), jnp.float32, -bound, bound)
    return params


def mlp_reference(x, params):
    """Pure-JAX reference (matches the PyTorch eval-mode forward)."""
    b, s, f = x.shape
    h = x.reshape(b, s * f)
    h = jnp.maximum(h @ params["w1"] + params["b1"], 0.0)
    h = jnp.maximum(h @ params["w2"] + params["b2"], 0.0)
    return h @ params["w3"] + params["b3"]


if __name__ == "__main__":
    # Small shapes implied by forward: x is (batch, seq_len, features).
    batch, seq_len, features = 2, 8, 4
    input_size = seq_len * features           # 32 after flatten
    hidden_sizes = [32, 16]
    output_size = 1

    key = jax.random.PRNGKey(0)
    key, kx = jax.random.split(key)
    x = jax.random.normal(kx, (batch, seq_len, features), jnp.float32)
    params = init_params(key, input_size, hidden_sizes, output_size)
    ref = mlp_reference(x, params)

    # f32 path: matches the PyTorch/f32 forward pass tightly.
    prep_f32 = prepare_params(params, jnp.float32)
    out = jax.block_until_ready(mlp_forward(x, prep_f32, output_size=output_size))
    assert out.shape == (batch, output_size), out.shape
    assert jnp.allclose(out, ref, atol=1e-5, rtol=1e-5), (out, ref)

    # bf16-at-MXU path (v6e/v7x throughput option): relaxed tolerance.
    prep_bf16 = prepare_params(params, jnp.bfloat16)
    out_bf16 = jax.block_until_ready(
        mlp_forward(x, prep_bf16, output_size=output_size))
    assert out_bf16.shape == (batch, output_size), out_bf16.shape
    assert jnp.allclose(out_bf16, ref, atol=5e-2, rtol=5e-2), (out_bf16, ref)

    # TODO(synk): training-mode Dropout (stochastic masking) is not implemented;
    # the kernel matches the module's eval/inference forward pass.
    print("KERNEL_OK")
</pallas_src>

<mosaic_0001>
module attributes {stable_mosaic.version = 11 : i64} {
  func.func @mlp_kernel(%arg0: i32, %arg1: memref<8x32xf32, #tpu.memory_space<vmem>>, %arg2: memref<32x128xf32, #tpu.memory_space<vmem>>, %arg3: memref<1x128xf32, #tpu.memory_space<vmem>>, %arg4: memref<128x128xf32, #tpu.memory_space<vmem>>, %arg5: memref<1x128xf32, #tpu.memory_space<vmem>>, %arg6: memref<128x128xf32, #tpu.memory_space<vmem>>, %arg7: memref<1x128xf32, #tpu.memory_space<vmem>>, %arg8: memref<8x128xf32, #tpu.memory_space<vmem>>) attributes {dimension_semantics = [#tpu.dimension_semantics<parallel>], iteration_bounds = array<i64: 1>, scalar_prefetch = 0 : i64, scratch_operands = 0 : i64, tpu.core_type = #tpu.core_type<tc>, window_params = [{transform_indices = @transform_0, window_bounds = array<i64: 8, 32>}, {pipeline_mode = #tpu.pipeline_mode<synchronous>, transform_indices = @transform_1, window_bounds = array<i64: 32, 128>}, {pipeline_mode = #tpu.pipeline_mode<synchronous>, transform_indices = @transform_2, window_bounds = array<i64: 1, 128>}, {pipeline_mode = #tpu.pipeline_mode<synchronous>, transform_indices = @transform_3, window_bounds = array<i64: 128, 128>}, {pipeline_mode = #tpu.pipeline_mode<synchronous>, transform_indices = @transform_4, window_bounds = array<i64: 1, 128>}, {pipeline_mode = #tpu.pipeline_mode<synchronous>, transform_indices = @transform_5, window_bounds = array<i64: 128, 128>}, {pipeline_mode = #tpu.pipeline_mode<synchronous>, transform_indices = @transform_6, window_bounds = array<i64: 1, 128>}, {transform_indices = @transform_7, window_bounds = array<i64: 8, 128>}]} {
    %c0 = arith.constant 0 : index
    %c0_0 = arith.constant 0 : index
    %0 = vector.load %arg1[%c0, %c0_0] : memref<8x32xf32, #tpu.memory_space<vmem>>, vector<8x32xf32>
    %c0_1 = arith.constant 0 : index
    %c0_2 = arith.constant 0 : index
    %1 = vector.load %arg2[%c0_1, %c0_2] : memref<32x128xf32, #tpu.memory_space<vmem>>, vector<32x128xf32>
    %cst = arith.constant dense<0.000000e+00> : vector<8x128xf32>
    %2 = tpu.matmul %0, %1, %cst {dimension_numbers = #tpu.dot_dimension_numbers<[1], [0], [0], [1], [0, 0, 1, 1], [], []>} : vector<8x32xf32>, vector<32x128xf32>, vector<8x128xf32> -> vector<8x128xf32>
    %c0_3 = arith.constant 0 : index
    %c0_4 = arith.constant 0 : index
    %3 = vector.load %arg3[%c0_3, %c0_4] : memref<1x128xf32, #tpu.memory_space<vmem>>, vector<1x128xf32>
    %4 = vector.broadcast %3 : vector<1x128xf32> to vector<8x128xf32>
    %5 = arith.addf %2, %4 : vector<8x128xf32>
    %cst_5 = arith.constant 0.000000e+00 : f32
    %6 = vector.broadcast %cst_5 : f32 to vector<8x128xf32>
    %7 = arith.maximumf %5, %6 : vector<8x128xf32>
    %c0_6 = arith.constant 0 : index
    %c0_7 = arith.constant 0 : index
    %8 = vector.load %arg4[%c0_6, %c0_7] : memref<128x128xf32, #tpu.memory_space<vmem>>, vector<128x128xf32>
    %cst_8 = arith.constant dense<0.000000e+00> : vector<8x128xf32>
    %9 = tpu.matmul %7, %8, %cst_8 {dimension_numbers = #tpu.dot_dimension_numbers<[1], [0], [0], [1], [0, 0, 1, 1], [], []>} : vector<8x128xf32>, vector<128x128xf32>, vector<8x128xf32> -> vector<8x128xf32>
    %c0_9 = arith.constant 0 : index
    %c0_10 = arith.constant 0 : index
    %10 = vector.load %arg5[%c0_9, %c0_10] : memref<1x128xf32, #tpu.memory_space<vmem>>, vector<1x128xf32>
    %11 = vector.broadcast %10 : vector<1x128xf32> to vector<8x128xf32>
    %12 = arith.addf %9, %11 : vector<8x128xf32>
    %cst_11 = arith.constant 0.000000e+00 : f32
    %13 = vector.broadcast %cst_11 : f32 to vector<8x128xf32>
    %14 = arith.maximumf %12, %13 : vector<8x128xf32>
    %c0_12 = arith.constant 0 : index
    %c0_13 = arith.constant 0 : index
    %15 = vector.load %arg6[%c0_12, %c0_13] : memref<128x128xf32, #tpu.memory_space<vmem>>, vector<128x128xf32>
    %cst_14 = arith.constant dense<0.000000e+00> : vector<8x128xf32>
    %16 = tpu.matmul %14, %15, %cst_14 {dimension_numbers = #tpu.dot_dimension_numbers<[1], [0], [0], [1], [0, 0, 1, 1], [], []>} : vector<8x128xf32>, vector<128x128xf32>, vector<8x128xf32> -> vector<8x128xf32>
    %c0_15 = arith.constant 0 : index
    %c0_16 = arith.constant 0 : index
    %17 = vector.load %arg7[%c0_15, %c0_16] : memref<1x128xf32, #tpu.memory_space<vmem>>, vector<1x128xf32>
    %18 = vector.broadcast %17 : vector<1x128xf32> to vector<8x128xf32>
    %19 = arith.addf %16, %18 : vector<8x128xf32>
    %c0_17 = arith.constant 0 : index
    %c0_18 = arith.constant 0 : index
    %20 = vector.load %arg8[%c0_17, %c0_18] : memref<8x128xf32, #tpu.memory_space<vmem>>, vector<8x128xf32>
    tpu.vector_store %arg8[%c0_17, %c0_18], %19 {strides = array<i32>} : memref<8x128xf32, #tpu.memory_space<vmem>>, vector<8x128xf32>,
    return
  }
  func.func @transform_0(%arg0: i32) -> (i32, i32) {
    %c0_i32 = arith.constant 0 : i32
    %c0_i32_0 = arith.constant 0 : i32
    return %arg0, %c0_i32 : i32, i32
  }
  func.func @transform_1(%arg0: i32) -> (i32, i32) {
    %c0_i32 = arith.constant 0 : i32
    %c0_i32_0 = arith.constant 0 : i32
    %c0_i32_1 = arith.constant 0 : i32
    return %c0_i32, %c0_i32_0 : i32, i32
  }
  func.func @transform_2(%arg0: i32) -> (i32, i32) {
    %c0_i32 = arith.constant 0 : i32
    %c0_i32_0 = arith.constant 0 : i32
    %c0_i32_1 = arith.constant 0 : i32
    return %c0_i32, %c0_i32_0 : i32, i32
  }
  func.func @transform_3(%arg0: i32) -> (i32, i32) {
    %c0_i32 = arith.constant 0 : i32
    %c0_i32_0 = arith.constant 0 : i32
    %c0_i32_1 = arith.constant 0 : i32
    return %c0_i32, %c0_i32_0 : i32, i32
  }
  func.func @transform_4(%arg0: i32) -> (i32, i32) {
    %c0_i32 = arith.constant 0 : i32
    %c0_i32_0 = arith.constant 0 : i32
    %c0_i32_1 = arith.constant 0 : i32
    return %c0_i32, %c0_i32_0 : i32, i32
  }
  func.func @transform_5(%arg0: i32) -> (i32, i32) {
    %c0_i32 = arith.constant 0 : i32
    %c0_i32_0 = arith.constant 0 : i32
    %c0_i32_1 = arith.constant 0 : i32
    return %c0_i32, %c0_i32_0 : i32, i32
  }
  func.func @transform_6(%arg0: i32) -> (i32, i32) {
    %c0_i32 = arith.constant 0 : i32
    %c0_i32_0 = arith.constant 0 : i32
    %c0_i32_1 = arith.constant 0 : i32
    return %c0_i32, %c0_i32_0 : i32, i32
  }
  func.func @transform_7(%arg0: i32) -> (i32, i32) {
    %c0_i32 = arith.constant 0 : i32
    %c0_i32_0 = arith.constant 0 : i32
    return %arg0, %c0_i32 : i32, i32
  }
}

</mosaic_0001>

<llo_original>
// kernel: mlp_forward.1
$region0: #{mlp_forward.1}
  #allocation0 [shape = 'u32[]', space=smem, size = 0x4, offset = 0x4, fixed_abs, tag = 'smem constant byte address 0x4 - core index']
  #allocation1 [shape = 'u32[144,128]{1,0:T(1,128)}', space=vmem, size = 0x12000, scoped, tag = 'internal scratch']
  %s0 = inlined_call_operand.vmem [shape: f32[2,32], index: 0, kind: input, shape index: {}]
  %s1 = inlined_call_operand.vmem [shape: f32[32,128], index: 1, kind: input, shape index: {}]
  %s2 = inlined_call_operand.vmem [shape: f32[1,128], index: 2, kind: input, shape index: {}]
  %s3 = inlined_call_operand.hbm [shape: f32[128,128], index: 3, kind: input, shape index: {}]
  %s4 = inlined_call_operand.vmem [shape: f32[1,128], index: 4, kind: input, shape index: {}]
  %s5 = inlined_call_operand.hbm [shape: f32[128,128], index: 5, kind: input, shape index: {}]
  %s6 = inlined_call_operand.vmem [shape: f32[1,128], index: 6, kind: input, shape index: {}]
  %s7 = inlined_call_operand.vmem [shape: f32[2,128], index: 7, kind: output, shape index: {}]
  %s8 = sld [smem:[#allocation0]]
  $region76: #{mlp_forward.1} parent=0
    _
  %s10 = ssub.s32 1, %s8
  %s11 = scalar_select 0, %s10, %s8
  $region1: #{mlp_forward.1} parent=0
    #allocation2 [shape = 'u8[65536]{0}', space=vmem, size = 0x10000, scoped, tag = 'input window, operand 3, single buffered']
    #allocation3 [shape = 's32[1]{0}', space=sflag, size = 0x4, scoped, tag = 'scoped memory for mlp_forward.1']
    #allocation4 [shape = 'u8[65536]{0}', space=vmem, size = 0x10000, scoped, tag = 'input window, operand 5, single buffered']
    #allocation5 [shape = 's32[1]{0}', space=sflag, size = 0x4, scoped, tag = 'scoped memory for mlp_forward.1']
    #allocation6 [shape = 'u8[4096]{0}', space=vmem, size = 0x1000, scoped, tag = 'output window, operand 0, single buffered']
    %12 = vsyncpa [#allocation3], 0
    %13 = vsyncpa [#allocation5], 0
    // Predicated region
    $region2: #{mlp_forward.1} parent=1 // pred_check
      _
    $region3: #{mlp_forward.1} parent=1 // pred_check_branch
      %15 = sbr.rel (0) target = $region5
    $region4: #{mlp_forward.1} parent=1 // pred_region
      _
    $region5: #{mlp_forward.1} parent=1 // pred_fallthru
      _
    // Predicated region
    $region6: #{mlp_forward.1} parent=1 // pred_check
      _
    $region7: #{mlp_forward.1} parent=1 // pred_check_branch
      %17 = sbr.rel (0) target = $region9
    $region8: #{mlp_forward.1} parent=1 // pred_region
      _
    $region9: #{mlp_forward.1} parent=1 // pred_fallthru
      _
    // Predicated region
    $region10: #{mlp_forward.1} parent=1 // pred_check
      _
    $region11: #{mlp_forward.1} parent=1 // pred_check_branch
      %19 = sbr.rel (0) target = $region13
    $region12: #{mlp_forward.1} parent=1 // pred_region
      _
    $region13: #{mlp_forward.1} parent=1 // pred_fallthru
      _
    // Predicated region
    $region14: #{mlp_forward.1} parent=1 // pred_check
      _
    $region15: #{mlp_forward.1} parent=1 // pred_check_branch
      %21 = sbr.rel (0) target = $region17
    $region16: #{mlp_forward.1} parent=1 // pred_region
      %s23 = ssub.s32 2048, 2048
      %24 = vsyncadd [#allocation3], %s23
      %s25 = sshll.u32 [#allocation2], 4
      %s26 = int_to_ptr.vmem [resolvable:$true] %s25
      %31 = dma.hbm_to_vmem [thread:$0]  %s3, 2048, %s26, [#allocation3], 128, 128, 8
    $region17: #{mlp_forward.1} parent=1 // pred_fallthru
      _
    // Predicated region
    $region18: #{mlp_forward.1} parent=1 // pred_check
      _
    $region19: #{mlp_forward.1} parent=1 // pred_check_branch
      %33 = sbr.rel (0) target = $region21
    $region20: #{mlp_forward.1} parent=1 // pred_region
      _
    $region21: #{mlp_forward.1} parent=1 // pred_fallthru
      _
    // Predicated region
    $region22: #{mlp_forward.1} parent=1 // pred_check
      _
    $region23: #{mlp_forward.1} parent=1 // pred_check_branch
      %35 = sbr.rel (0) target = $region25
    $region24: #{mlp_forward.1} parent=1 // pred_region
      %s37 = ssub.s32 2048, 2048
      %38 = vsyncadd [#allocation5], %s37
      %s39 = sshll.u32 [#allocation4], 4
      %s40 = int_to_ptr.vmem [resolvable:$true] %s39
      %45 = dma.hbm_to_vmem [thread:$0]  %s5, 2048, %s40, [#allocation5], 128, 128, 8
    $region25: #{mlp_forward.1} parent=1 // pred_fallthru
      _
    // Predicated region
    $region26: #{mlp_forward.1} parent=1 // pred_check
      _
    $region27: #{mlp_forward.1} parent=1 // pred_check_branch
      %47 = sbr.rel (0) target = $region29
    $region28: #{mlp_forward.1} parent=1 // pred_region
      _
    $region29: #{mlp_forward.1} parent=1 // pred_fallthru
      _
    // Predicated region
    $region30: #{mlp_forward.1} parent=1 // pred_check
      _
    $region31: #{mlp_forward.1} parent=1 // pred_check_branch
      %49 = sbr.rel (0) target = $region33
    $region32: #{mlp_forward.1} parent=1 // pred_region
      %50 = dma.done [#allocation3], 2048
    $region33: #{mlp_forward.1} parent=1 // pred_fallthru
      _
    // Predicated region
    $region34: #{mlp_forward.1} parent=1 // pred_check
      _
    $region35: #{mlp_forward.1} parent=1 // pred_check_branch
      %52 = sbr.rel (0) target = $region37
    $region36: #{mlp_forward.1} parent=1 // pred_region
      %53 = dma.done [#allocation5], 2048
    $region37: #{mlp_forward.1} parent=1 // pred_fallthru
      _
    %v54 = vld [vmem:[%s0] sm:$0xff]
    %v55 = vld [vmem:[%s1] sm:$0xff]
    %v56 = vld [vmem:[%s1 + $0x8] sm:$0xff]
    %v57 = vld [vmem:[%s1 + $0x10] sm:$0xff]
    %v58 = vld [vmem:[%s1 + $0x18] sm:$0xff]
    %v59 = vld [vmem:[%s2] sm:$0x1]
    %v61 = vlaneseq
    %v62 = vshrl.u32 %v61, 7
    %v63 = vsub.s32 0, %v62
    %v64 = vrot.slane %v59, %v63
    %vm66 = vcmask 261120
    %v68 = vsel %vm66, %v54, 0
    %70 = vmatprep.subr.mxu0 0.0
    %71 = vmatpush1.msra.mxu0 %v55
    %72 = vmatprep.subr.mxu0 0.0
    %73 = vmatpush1.msra.mxu0 %v56
    %74 = vmatprep.subr.mxu0 0.0
    %75 = vmatpush1.msra.mxu0 %v57
    %76 = vmatprep.subr.mxu0 0.0
    %77 = vmatpush1.msra.mxu0 %v58
    %78 = vmatprep.subr.mxu0 0.0
    %79 = vmatpush1.msra.mxu0 0.0
    %80 = vmatprep.subr.mxu0 0.0
    %81 = vmatpush1.msra.mxu0 0.0
    %82 = vmatprep.subr.mxu0 0.0
    %83 = vmatpush1.msra.mxu0 0.0
    %84 = vmatprep.subr.mxu0 0.0
    %85 = vmatpush1.msra.mxu0 0.0
    %86 = vmatprep.subr.mxu0 0.0
    %87 = vmatpush1.msra.mxu0 0.0
    %88 = vmatprep.subr.mxu0 0.0
    %89 = vmatpush1.msra.mxu0 0.0
    %90 = vmatprep.subr.mxu0 0.0
    %91 = vmatpush1.msra.mxu0 0.0
    %92 = vmatprep.subr.mxu0 0.0
    %93 = vmatpush1.msra.mxu0 0.0
    %94 = vmatprep.subr.mxu0 0.0
    %95 = vmatpush1.msra.mxu0 0.0
    %96 = vmatprep.subr.mxu0 0.0
    %97 = vmatpush1.msra.mxu0 0.0
    %98 = vmatprep.subr.mxu0 0.0
    %99 = vmatpush1.msra.mxu0 0.0
    %100 = vmatprep.subr.mxu0 0.0
    %101 = vmatpush1.msra.mxu0 0.0
    %102 = vmatprep.subr.mxu0 0.0
    %103 = vmatpush1.msra.mxu0 0.0
    %104 = vmatprep.subr.mxu0 0.0
    %105 = vmatpush1.msra.mxu0 0.0
    %106 = vmatprep.subr.mxu0 0.0
    %107 = vmatpush1.msra.mxu0 0.0
    %108 = vmatprep.subr.mxu0 0.0
    %109 = vmatpush1.msra.mxu0 0.0
    %110 = vmatprep.subr.mxu0 0.0
    %111 = vmatpush1.msra.mxu0 0.0
    %112 = vmatprep.subr.mxu0 0.0
    %113 = vmatpush1.msra.mxu0 0.0
    %114 = vmatprep.subr.mxu0 0.0
    %115 = vmatpush1.msra.mxu0 0.0
    %116 = vmatprep.subr.mxu0 0.0
    %117 = vmatpush1.msra.mxu0 0.0
    %118 = vmatprep.subr.mxu0 0.0
    %119 = vmatpush1.msra.mxu0 0.0
    %120 = vmatprep.subr.mxu0 0.0
    %121 = vmatpush1.msra.mxu0 0.0
    %122 = vmatprep.subr.mxu0 0.0
    %123 = vmatpush1.msra.mxu0 0.0
    %124 = vmatprep.subr.mxu0 0.0
    %125 = vmatpush1.msra.mxu0 0.0
    %126 = vmatprep.subr.mxu0 0.0
    %127 = vmatpush1.msra.mxu0 0.0
    %128 = vmatprep.subr.mxu0 0.0
    %129 = vmatpush1.msra.mxu0 0.0
    %130 = vmatprep.subr.mxu0 0.0
    %131 = vmatpush1.msra.mxu0 0.0
    %132 = vmatprep.subr.mxu0 0.0
    %133 = vmatpush1.msra.mxu0 0.0
    %134 = vmatprep.mubr.f32.mxu0 0.0
    %135 = vmatmul.mubr.f32.gmra.mrb[0].mxu0 %v68
    %v136 = vpop.f32.mrb[0].mxu0
    %v137 = vadd.f32 %v64, %v136
    %v138 = vpop.f32.mrb[0].mxu0
    %139 = vdwg.mxu0
    %v140 = vmax.f32 %v137, 0.0
    %v141 = vld [vmem:[#allocation2] sm:$0xff]
    %v142 = vld [vmem:[#allocation2 + $0x8] sm:$0xff]
    %v143 = vld [vmem:[#allocation2 + $0x10] sm:$0xff]
    %v144 = vld [vmem:[#allocation2 + $0x18] sm:$0xff]
    %v145 = vld [vmem:[#allocation2 + $0x20] sm:$0xff]
    %v146 = vld [vmem:[#allocation2 + $0x28] sm:$0xff]
    %v147 = vld [vmem:[#allocation2 + $0x30] sm:$0xff]
    %v148 = vld [vmem:[#allocation2 + $0x38] sm:$0xff]
    %v149 = vld [vmem:[#allocation2 + $0x40] sm:$0xff]
    %v150 = vld [vmem:[#allocation2 + $0x48] sm:$0xff]
    %v151 = vld [vmem:[#allocation2 + $0x50] sm:$0xff]
    %v152 = vld [vmem:[#allocation2 + $0x58] sm:$0xff]
    %v153 = vld [vmem:[#allocation2 + $0x60] sm:$0xff]
    %v154 = vld [vmem:[#allocation2 + $0x68] sm:$0xff]
    %v155 = vld [vmem:[#allocation2 + $0x70] sm:$0xff]
    %v156 = vld [vmem:[#allocation2 + $0x78] sm:$0xff]
    %v157 = vld [vmem:[%s4] sm:$0x1]
    %v159 = vlaneseq
    %v160 = vshrl.u32 %v159, 7
    %v161 = vsub.s32 0, %v160
    %v162 = vrot.slane %v157, %v161
    %164 = vmatprep.subr.mxu0 0.0
    %165 = vmatpush1.msra.mxu0 %v141
    %166 = vmatprep.subr.mxu0 0.0
    %167 = vmatpush1.msra.mxu0 %v142
    %168 = vmatprep.subr.mxu0 0.0
    %169 = vmatpush1.msra.mxu0 %v143
    %170 = vmatprep.subr.mxu0 0.0
    %171 = vmatpush1.msra.mxu0 %v144
    %172 = vmatprep.subr.mxu0 0.0
    %173 = vmatpush1.msra.mxu0 %v145
    %174 = vmatprep.subr.mxu0 0.0
    %175 = vmatpush1.msra.mxu0 %v146
    %176 = vmatprep.subr.mxu0 0.0
    %177 = vmatpush1.msra.mxu0 %v147
    %178 = vmatprep.subr.mxu0 0.0
    %179 = vmatpush1.msra.mxu0 %v148
    %180 = vmatprep.subr.mxu0 0.0
    %181 = vmatpush1.msra.mxu0 %v149
    %182 = vmatprep.subr.mxu0 0.0
    %183 = vmatpush1.msra.mxu0 %v150
    %184 = vmatprep.subr.mxu0 0.0
    %185 = vmatpush1.msra.mxu0 %v151
    %186 = vmatprep.subr.mxu0 0.0
    %187 = vmatpush1.msra.mxu0 %v152
    %188 = vmatprep.subr.mxu0 0.0
    %189 = vmatpush1.msra.mxu0 %v153
    %190 = vmatprep.subr.mxu0 0.0
    %191 = vmatpush1.msra.mxu0 %v154
    %192 = vmatprep.subr.mxu0 0.0
    %193 = vmatpush1.msra.mxu0 %v155
    %194 = vmatprep.subr.mxu0 0.0
    %195 = vmatpush1.msra.mxu0 %v156
    %196 = vmatprep.subr.mxu0 0.0
    %197 = vmatpush1.msra.mxu0 0.0
    %198 = vmatprep.subr.mxu0 0.0
    %199 = vmatpush1.msra.mxu0 0.0
    %200 = vmatprep.subr.mxu0 0.0
    %201 = vmatpush1.msra.mxu0 0.0
    %202 = vmatprep.subr.mxu0 0.0
    %203 = vmatpush1.msra.mxu0 0.0
    %204 = vmatprep.subr.mxu0 0.0
    %205 = vmatpush1.msra.mxu0 0.0
    %206 = vmatprep.subr.mxu0 0.0
    %207 = vmatpush1.msra.mxu0 0.0
    %208 = vmatprep.subr.mxu0 0.0
    %209 = vmatpush1.msra.mxu0 0.0
    %210 = vmatprep.subr.mxu0 0.0
    %211 = vmatpush1.msra.mxu0 0.0
    %212 = vmatprep.subr.mxu0 0.0
    %213 = vmatpush1.msra.mxu0 0.0
    %214 = vmatprep.subr.mxu0 0.0
    %215 = vmatpush1.msra.mxu0 0.0
    %216 = vmatprep.subr.mxu0 0.0
    %217 = vmatpush1.msra.mxu0 0.0
    %218 = vmatprep.subr.mxu0 0.0
    %219 = vmatpush1.msra.mxu0 0.0
    %220 = vmatprep.subr.mxu0 0.0
    %221 = vmatpush1.msra.mxu0 0.0
    %222 = vmatprep.subr.mxu0 0.0
    %223 = vmatpush1.msra.mxu0 0.0
    %224 = vmatprep.subr.mxu0 0.0
    %225 = vmatpush1.msra.mxu0 0.0
    %226 = vmatprep.subr.mxu0 0.0
    %227 = vmatpush1.msra.mxu0 0.0
    %228 = vmatprep.mubr.f32.mxu0 0.0
    %229 = vmatmul.mubr.f32.gmra.mrb[0].mxu0 %v140
    %v230 = vpop.f32.mrb[0].mxu0
    %v231 = vadd.f32 %v162, %v230
    %v232 = vpop.f32.mrb[0].mxu0
    %233 = vdwg.mxu0
    %v234 = vmax.f32 %v231, 0.0
    %v235 = vld [vmem:[#allocation4] sm:$0xff]
    %v236 = vld [vmem:[#allocation4 + $0x8] sm:$0xff]
    %v237 = vld [vmem:[#allocation4 + $0x10] sm:$0xff]
    %v238 = vld [vmem:[#allocation4 + $0x18] sm:$0xff]
    %v239 = vld [vmem:[#allocation4 + $0x20] sm:$0xff]
    %v240 = vld [vmem:[#allocation4 + $0x28] sm:$0xff]
    %v241 = vld [vmem:[#allocation4 + $0x30] sm:$0xff]
    %v242 = vld [vmem:[#allocation4 + $0x38] sm:$0xff]
    %v243 = vld [vmem:[#allocation4 + $0x40] sm:$0xff]
    %v244 = vld [vmem:[#allocation4 + $0x48] sm:$0xff]
    %v245 = vld [vmem:[#allocation4 + $0x50] sm:$0xff]
    %v246 = vld [vmem:[#allocation4 + $0x58] sm:$0xff]
    %v247 = vld [vmem:[#allocation4 + $0x60] sm:$0xff]
    %v248 = vld [vmem:[#allocation4 + $0x68] sm:$0xff]
    %v249 = vld [vmem:[#allocation4 + $0x70] sm:$0xff]
    %v250 = vld [vmem:[#allocation4 + $0x78] sm:$0xff]
    %v251 = vld [vmem:[%s6] sm:$0x1]
    %v253 = vlaneseq
    %v254 = vshrl.u32 %v253, 7
    %v255 = vsub.s32 0, %v254
    %v256 = vrot.slane %v251, %v255
    %258 = vmatprep.subr.mxu0 0.0
    %259 = vmatpush1.msra.mxu0 %v235
    %260 = vmatprep.subr.mxu0 0.0
    %261 = vmatpush1.msra.mxu0 %v236
    %262 = vmatprep.subr.mxu0 0.0
    %263 = vmatpush1.msra.mxu0 %v237
    %264 = vmatprep.subr.mxu0 0.0
    %265 = vmatpush1.msra.mxu0 %v238
    %266 = vmatprep.subr.mxu0 0.0
    %267 = vmatpush1.msra.mxu0 %v239
    %268 = vmatprep.subr.mxu0 0.0
    %269 = vmatpush1.msra.mxu0 %v240
    %270 = vmatprep.subr.mxu0 0.0
    %271 = vmatpush1.msra.mxu0 %v241
    %272 = vmatprep.subr.mxu0 0.0
    %273 = vmatpush1.msra.mxu0 %v242
    %274 = vmatprep.subr.mxu0 0.0
    %275 = vmatpush1.msra.mxu0 %v243
    %276 = vmatprep.subr.mxu0 0.0
    %277 = vmatpush1.msra.mxu0 %v244
    %278 = vmatprep.subr.mxu0 0.0
    %279 = vmatpush1.msra.mxu0 %v245
    %280 = vmatprep.subr.mxu0 0.0
    %281 = vmatpush1.msra.mxu0 %v246
    %282 = vmatprep.subr.mxu0 0.0
    %283 = vmatpush1.msra.mxu0 %v247
    %284 = vmatprep.subr.mxu0 0.0
    %285 = vmatpush1.msra.mxu0 %v248
    %286 = vmatprep.subr.mxu0 0.0
    %287 = vmatpush1.msra.mxu0 %v249
    %288 = vmatprep.subr.mxu0 0.0
    %289 = vmatpush1.msra.mxu0 %v250
    %290 = vmatprep.subr.mxu0 0.0
    %291 = vmatpush1.msra.mxu0 0.0
    %292 = vmatprep.subr.mxu0 0.0
    %293 = vmatpush1.msra.mxu0 0.0
    %294 = vmatprep.subr.mxu0 0.0
    %295 = vmatpush1.msra.mxu0 0.0
    %296 = vmatprep.subr.mxu0 0.0
    %297 = vmatpush1.msra.mxu0 0.0
    %298 = vmatprep.subr.mxu0 0.0
    %299 = vmatpush1.msra.mxu0 0.0
    %300 = vmatprep.subr.mxu0 0.0
    %301 = vmatpush1.msra.mxu0 0.0
    %302 = vmatprep.subr.mxu0 0.0
    %303 = vmatpush1.msra.mxu0 0.0
    %304 = vmatprep.subr.mxu0 0.0
    %305 = vmatpush1.msra.mxu0 0.0
    %306 = vmatprep.subr.mxu0 0.0
    %307 = vmatpush1.msra.mxu0 0.0
    %308 = vmatprep.subr.mxu0 0.0
    %309 = vmatpush1.msra.mxu0 0.0
    %310 = vmatprep.subr.mxu0 0.0
    %311 = vmatpush1.msra.mxu0 0.0
    %312 = vmatprep.subr.mxu0 0.0
    %313 = vmatpush1.msra.mxu0 0.0
    %314 = vmatprep.subr.mxu0 0.0
    %315 = vmatpush1.msra.mxu0 0.0
    %316 = vmatprep.subr.mxu0 0.0
    %317 = vmatpush1.msra.mxu0 0.0
    %318 = vmatprep.subr.mxu0 0.0
    %319 = vmatpush1.msra.mxu0 0.0
    %320 = vmatprep.subr.mxu0 0.0
    %321 = vmatpush1.msra.mxu0 0.0
    %322 = vmatprep.mubr.f32.mxu0 0.0
    %323 = vmatmul.mubr.f32.gmra.mrb[0].mxu0 %v234
    %v324 = vpop.f32.mrb[0].mxu0
    %v325 = vadd.f32 %v256, %v324
    %v326 = vpop.f32.mrb[0].mxu0
    %327 = vdwg.mxu0
    %328 = vst [vmem:[#allocation6] sm:$0xff] %v325
    // Predicated region
    $region38: #{mlp_forward.1} parent=1 // pred_check
      _
    $region39: #{mlp_forward.1} parent=1 // pred_check_branch
      %330 = sbr.rel (0) target = $region41
    $region40: #{mlp_forward.1} parent=1 // pred_region
      // Predicated region
      $region42: #{mlp_forward.1} parent=40 // pred_check
        _
      $region43: #{mlp_forward.1} parent=40 // pred_check_branch
        %332 = sbr.rel (0) target = $region45
      $region44: #{mlp_forward.1} parent=40 // pred_region
        // Predicated region
        $region46: #{mlp_forward.1} parent=44 // pred_check
          _
        $region47: #{mlp_forward.1} parent=44 // pred_check_branch
          %334 = sbr.rel target = $region49
        $region48: #{mlp_forward.1} parent=44 // pred_region
          // Predicated region
          $region61: #{mlp_forward.1} parent=48 // pred_check
            _
          $region62: #{mlp_forward.1} parent=48 // pred_check_branch
            %349 = sbr.rel (0) target = $region64
          $region63: #{mlp_forward.1} parent=48 // pred_region
            loop: start=0, step=1, limit=1
            $region65: #{mlp_forward.1} parent=63 // loop_pre_header
              _
            $region66: #{mlp_forward.1} parent=63 // loop_header
              %s352 = sphi 0, %s356
              %p353 = scmp.ge.s32.totalorder %s352, 1
              %s357 = sphi [#allocation6], [#allocation6]
              %s358 = sphi %s7, %s7
            $region67: #{mlp_forward.1} parent=63 // loop_header_branch
              %355 = sbr.rel (%p353) target = $region71
            $region68: #{mlp_forward.1} parent=63 // loop_body
              %v359 = vld [vmem:[%s357] sm:$0x3]
              %360 = vst [vmem:[%s358] sm:$0x3] %v359
            $region69: #{mlp_forward.1} parent=63 // loop_footer
              %s356 = sadd.s32 1, %s352
            $region70: #{mlp_forward.1} parent=63 // loop_footer_branch
              %351 = sbr.rel target = $region66
            $region71: #{mlp_forward.1} parent=63 // loop_exit
              _
          $region64: #{mlp_forward.1} parent=48 // pred_fallthru
            _
        $region49: #{mlp_forward.1} parent=44 // pred_fallthru
          _
        // Predicated region
        $region50: #{mlp_forward.1} parent=44 // pred_check
          _
        $region51: #{mlp_forward.1} parent=44 // pred_check_branch
          %336 = sbr.rel (0) target = $region53
        $region52: #{mlp_forward.1} parent=44 // pred_region
          loop: start=0, step=1, limit=1
          $region54: #{mlp_forward.1} parent=52 // loop_pre_header
            _
          $region55: #{mlp_forward.1} parent=52 // loop_header
            %s339 = sphi 0, %s343
            %p340 = scmp.ge.s32.totalorder %s339, 1
            %s344 = sphi [#allocation6], [#allocation6]
            %s345 = sphi %s7, %s7
          $region56: #{mlp_forward.1} parent=52 // loop_header_branch
            %342 = sbr.rel (%p340) target = $region60
          $region57: #{mlp_forward.1} parent=52 // loop_body
            %v346 = vld [vmem:[%s344] sm:$0x3]
            %347 = vst [vmem:[%s345] sm:$0x3] %v346
          $region58: #{mlp_forward.1} parent=52 // loop_footer
            %s343 = sadd.s32 1, %s339
          $region59: #{mlp_forward.1} parent=52 // loop_footer_branch
            %338 = sbr.rel target = $region55
          $region60: #{mlp_forward.1} parent=52 // loop_exit
            _
        $region53: #{mlp_forward.1} parent=44 // pred_fallthru
          _
      $region45: #{mlp_forward.1} parent=40 // pred_fallthru
        _
      %361 = vnop
    $region41: #{mlp_forward.1} parent=1 // pred_fallthru
      _
    // Predicated region
    $region72: #{mlp_forward.1} parent=1 // pred_check
      _
    $region73: #{mlp_forward.1} parent=1 // pred_check_branch
      %363 = sbr.rel (0) target = $region75
    $region74: #{mlp_forward.1} parent=1 // pred_region
      _
    $region75: #{mlp_forward.1} parent=1 // pred_fallthru
      _
    %364 = vsyncpa [#allocation3], 1
    %365 = vsyncpa [#allocation5], 1

</llo_original>
